<compile_context>
chip_gen: v5e
topology: v5e:2x2
jax: 0.10.0
libtpu: 0.0.40
codegen_flags: <defaults>
</compile_context>

<pallas_src>
import functools

import jax
import jax.numpy as jnp
from jax.experimental import pallas as pl
from jax.experimental.pallas import tpu as pltpu

LANE = 128
SUBLANE = 8


def _round_up(n, m):
    return ((n + m - 1) // m) * m


def _mlp_kernel(n_layers, *refs):
    """Fused MLP forward for one batch tile.

    refs = (x_ref, w0_ref, ..., w{n-1}_ref, b0_ref, ..., b{n-1}_ref, out_ref)
    Weights arrive pre-transposed / lane-padded as bf16 (in_pad, out_pad);
    biases as f32 (1, out_pad).  Matmuls accumulate in f32 on the MXU; the
    bias add and ReLU stay in f32 (v5e has no bf16 VALU).  The tile is split
    into two independent row sub-chunks so the MXU matmul of one chunk
    overlaps the VPU epilogue of the other.
    """
    x_ref = refs[0]
    w_refs = refs[1:1 + n_layers]
    b_refs = refs[1 + n_layers:1 + 2 * n_layers]
    o_ref = refs[1 + 2 * n_layers]

    tb = x_ref.shape[0]
    # Split point kept sublane-aligned; only chunk when both halves have >= 8 rows.
    split = (tb // 2) // SUBLANE * SUBLANE
    if split >= SUBLANE and (tb - split) >= SUBLANE:
        bounds = [(0, split), (split, tb)]
    else:
        bounds = [(0, tb)]

    chunks = [x_ref[lo:hi, :].astype(jnp.bfloat16) for lo, hi in bounds]
    for i in range(n_layers):
        last = i == n_layers - 1
        # Two independent MXU chains -> the scheduler interleaves chunk-B's
        # matmul with chunk-A's bias+ReLU+bf16 pack (and the MRF pop).
        accs = [jnp.dot(h, w_refs[i][...], preferred_element_type=jnp.float32)
                for h in chunks]
        accs = [a + b_refs[i][...] for a in accs]
        if last:
            for (lo, hi), a in zip(bounds, accs):
                o_ref[lo:hi, :] = a.astype(o_ref.dtype)   # lane-dense bf16 store
        else:
            chunks = [jnp.maximum(a, 0.0).astype(jnp.bfloat16) for a in accs]


def prepare_params(weights, biases):
    """One-time parameter preparation (keep OUT of the per-step hot path).

    Transposes nn.Linear weights to (in, out), zero-pads every layer's output
    dim (and the matching next-layer input dim) up to the 128-lane width, and
    casts weights to bf16.  Padded columns carry zero weight and zero bias, so
    the math is unchanged; the wrapper slices the padding off the final output.
    (128 is the right pad on all generations - no benefit from padding to 256.)
    """
    n = len(weights)
    wts, bss = [], []
    prev_width = weights[0].shape[1]              # obs_dim: K of the 1st matmul, left as-is
    for i in range(n):
        out_i, in_i = weights[i].shape
        out_pad = _round_up(out_i, LANE)
        w = jnp.zeros((prev_width, out_pad), jnp.float32)
        w = w.at[:in_i, :out_i].set(jnp.asarray(weights[i], jnp.float32).T)
        wts.append(w.astype(jnp.bfloat16))
        b = jnp.zeros((1, out_pad), jnp.float32)
        b = b.at[0, :out_i].set(jnp.asarray(biases[i], jnp.float32))
        bss.append(b)
        prev_width = out_pad
    return wts, bss


def _choose_batch_tile(B, block_batch):
    """Pick (tile_rows, padded_batch): tile multiple of 8 sublanes, capped at
    block_batch, and an even number >= 2 of tiles whenever B >= 16 so the
    'parallel' batch axis can shard across v7x's two TensorCores."""
    padded_b = _round_up(B, SUBLANE)
    n_tiles = max(pl.cdiv(padded_b, block_batch), 2)
    if n_tiles % 2:
        n_tiles += 1
    tb = _round_up(pl.cdiv(padded_b, n_tiles), SUBLANE)
    padded_b = _round_up(padded_b, tb)
    return tb, padded_b


def mlp_forward(x, wts, bss, out_dim, *, block_batch=1024):
    """Run the fused MLP Pallas kernel.

    Args:
      x:       (B, obs_dim) float32
      wts/bss: output of prepare_params (pre-transposed / padded / bf16)
      out_dim: true actions_dim (padding is sliced off)
    Returns:
      (B, out_dim) float32 logits
    """
    n_layers = len(wts)
    B, in_dim = x.shape
    out_pad = wts[-1].shape[1]

    tb, padded_b = _choose_batch_tile(B, block_batch)
    if padded_b != B:
        x = jnp.pad(x, ((0, padded_b - B), (0, 0)))
    grid = (padded_b // tb,)

    kernel = functools.partial(_mlp_kernel, n_layers)
    # bf16 output: halves the (64x-inflated) lane-padded writeback traffic; the
    # math is already bf16-limited by the weights.  Wrapper casts back to f32.
    out_shape = jax.ShapeDtypeStruct((padded_b, out_pad), jnp.bfloat16)
    out_specs = pl.BlockSpec((tb, out_pad), lambda i: (i, 0))

    def build_and_run(wb_kwargs):
        in_specs = [pl.BlockSpec((tb, in_dim), lambda i: (i, 0))]
        # Weights / biases: constant index_map -> VMEM-resident across all tiles.
        in_specs += [pl.BlockSpec(w.shape, lambda i: (0, 0), **wb_kwargs) for w in wts]
        in_specs += [pl.BlockSpec(b.shape, lambda i: (0, 0), **wb_kwargs) for b in bss]
        return pl.pallas_call(
            kernel,
            out_shape=out_shape,
            grid=grid,
            in_specs=in_specs,
            out_specs=out_specs,
            compiler_params=pltpu.CompilerParams(
                dimension_semantics=("parallel",)),   # megacore sharding on v7x
        )(x, *wts, *bss)

    try:
        # Weight/bias data never changes across grid steps: hint single-buffering
        # so the pipeline doesn't allocate a second copy or schedule redundant
        # DMAs.  Fall back cleanly on JAX versions that reject the hint.
        out = build_and_run(dict(pipeline_mode=pl.Buffered(1)))
    except Exception:  # version-dependent optional hint; correctness unaffected
        out = build_and_run({})

    return out[:B, :out_dim].astype(jnp.float32)


def reference_forward(x, weights, biases):
    """Pure-JAX f32 reference matching torch semantics (y = x @ W.T + b)."""
    h = x
    n = len(weights)
    for i in range(n):
        h = h @ weights[i].T + biases[i]
        if i < n - 1:
            h = jnp.maximum(h, 0.0)
    return h


def init_params(key, observation_dim, actions_dim, sizes):
    """Deterministic synthetic parameters with nn.Linear shapes: W (out, in), b (out,)."""
    dims = [observation_dim] + list(sizes) + [actions_dim]
    weights, biases = [], []
    for i in range(len(dims) - 1):
        key, kw, kb = jax.random.split(key, 3)
        fan_in, fan_out = dims[i], dims[i + 1]
        bound = 1.0 / jnp.sqrt(fan_in)
        weights.append(jax.random.uniform(kw, (fan_out, fan_in), jnp.float32,
                                          minval=-bound, maxval=bound))
        biases.append(jax.random.uniform(kb, (fan_out,), jnp.float32,
                                         minval=-bound, maxval=bound))
    return weights, biases


if __name__ == "__main__":
    # CartPole-v1 vectorized env: observation_dim=4, actions_dim=2.
    observation_dim = 4
    actions_dim = 2
    sizes = (32, 32)

    key = jax.random.PRNGKey(0)
    weights, biases = init_params(key, observation_dim, actions_dim, sizes)

    # One-time parameter prep (transpose / pad / bf16) — outside the hot path.
    wts, bss = prepare_params(weights, biases)

    # (a) shipped env size: num_envs = 8 (single tile; overhead-bound by design).
    # (b) large vectorized batch: 256 envs (grid of 2 parallel tiles, chunked body).
    for batch in (8, 256):
        key, kx = jax.random.split(key)
        x = jax.random.normal(kx, (batch, observation_dim), jnp.float32)

        out = mlp_forward(x, wts, bss, actions_dim)
        out = jax.block_until_ready(out)

        ref = reference_forward(x, weights, biases)
        assert out.shape == (batch, actions_dim), out.shape
        # Tolerance loosened for bf16 matmul operands / bf16 output store
        # (f32 accumulation on the MXU).
        assert jnp.allclose(out, ref, atol=4e-2, rtol=4e-2), (
            batch, float(jnp.max(jnp.abs(out - ref))))

    print("KERNEL_OK")
</pallas_src>

<mosaic_0001>
module attributes {stable_mosaic.version = 11 : i64} {
  func.func @_mlp_kernel(%arg0: i32, %arg1: memref<8x4xf32, #tpu.memory_space<vmem>>, %arg2: memref<4x128xbf16, #tpu.memory_space<vmem>>, %arg3: memref<128x128xbf16, #tpu.memory_space<vmem>>, %arg4: memref<128x128xbf16, #tpu.memory_space<vmem>>, %arg5: memref<1x128xf32, #tpu.memory_space<vmem>>, %arg6: memref<1x128xf32, #tpu.memory_space<vmem>>, %arg7: memref<1x128xf32, #tpu.memory_space<vmem>>, %arg8: memref<8x128xbf16, #tpu.memory_space<vmem>>) attributes {dimension_semantics = [#tpu.dimension_semantics<parallel>], iteration_bounds = array<i64: 1>, scalar_prefetch = 0 : i64, scratch_operands = 0 : i64, tpu.core_type = #tpu.core_type<tc>, window_params = [{transform_indices = @transform_0, window_bounds = array<i64: 8, 4>}, {pipeline_mode = #tpu.pipeline_mode<synchronous>, transform_indices = @transform_1, window_bounds = array<i64: 4, 128>}, {pipeline_mode = #tpu.pipeline_mode<synchronous>, transform_indices = @transform_2, window_bounds = array<i64: 128, 128>}, {pipeline_mode = #tpu.pipeline_mode<synchronous>, transform_indices = @transform_3, window_bounds = array<i64: 128, 128>}, {pipeline_mode = #tpu.pipeline_mode<synchronous>, transform_indices = @transform_4, window_bounds = array<i64: 1, 128>}, {pipeline_mode = #tpu.pipeline_mode<synchronous>, transform_indices = @transform_5, window_bounds = array<i64: 1, 128>}, {pipeline_mode = #tpu.pipeline_mode<synchronous>, transform_indices = @transform_6, window_bounds = array<i64: 1, 128>}, {transform_indices = @transform_7, window_bounds = array<i64: 8, 128>}]} {
    %c0 = arith.constant 0 : index
    %c0_0 = arith.constant 0 : index
    %0 = vector.load %arg1[%c0, %c0_0] : memref<8x4xf32, #tpu.memory_space<vmem>>, vector<8x4xf32>
    %1 = arith.truncf %0 : vector<8x4xf32> to vector<8x4xbf16>
    %c0_1 = arith.constant 0 : index
    %c0_2 = arith.constant 0 : index
    %2 = vector.load %arg2[%c0_1, %c0_2] : memref<4x128xbf16, #tpu.memory_space<vmem>>, vector<4x128xbf16>
    %cst = arith.constant dense<0.000000e+00> : vector<8x128xf32>
    %3 = tpu.matmul %1, %2, %cst {dimension_numbers = #tpu.dot_dimension_numbers<[1], [0], [0], [1], [0, 0, 1, 1], [], []>} : vector<8x4xbf16>, vector<4x128xbf16>, vector<8x128xf32> -> vector<8x128xf32>
    %c0_3 = arith.constant 0 : index
    %c0_4 = arith.constant 0 : index
    %4 = vector.load %arg5[%c0_3, %c0_4] : memref<1x128xf32, #tpu.memory_space<vmem>>, vector<1x128xf32>
    %5 = vector.broadcast %4 : vector<1x128xf32> to vector<8x128xf32>
    %6 = arith.addf %3, %5 : vector<8x128xf32>
    %cst_5 = arith.constant 0.000000e+00 : f32
    %7 = vector.broadcast %cst_5 : f32 to vector<8x128xf32>
    %8 = arith.maximumf %6, %7 : vector<8x128xf32>
    %9 = arith.truncf %8 : vector<8x128xf32> to vector<8x128xbf16>
    %c0_6 = arith.constant 0 : index
    %c0_7 = arith.constant 0 : index
    %10 = vector.load %arg3[%c0_6, %c0_7] : memref<128x128xbf16, #tpu.memory_space<vmem>>, vector<128x128xbf16>
    %cst_8 = arith.constant dense<0.000000e+00> : vector<8x128xf32>
    %11 = tpu.matmul %9, %10, %cst_8 {dimension_numbers = #tpu.dot_dimension_numbers<[1], [0], [0], [1], [0, 0, 1, 1], [], []>} : vector<8x128xbf16>, vector<128x128xbf16>, vector<8x128xf32> -> vector<8x128xf32>
    %c0_9 = arith.constant 0 : index
    %c0_10 = arith.constant 0 : index
    %12 = vector.load %arg6[%c0_9, %c0_10] : memref<1x128xf32, #tpu.memory_space<vmem>>, vector<1x128xf32>
    %13 = vector.broadcast %12 : vector<1x128xf32> to vector<8x128xf32>
    %14 = arith.addf %11, %13 : vector<8x128xf32>
    %cst_11 = arith.constant 0.000000e+00 : f32
    %15 = vector.broadcast %cst_11 : f32 to vector<8x128xf32>
    %16 = arith.maximumf %14, %15 : vector<8x128xf32>
    %17 = arith.truncf %16 : vector<8x128xf32> to vector<8x128xbf16>
    %c0_12 = arith.constant 0 : index
    %c0_13 = arith.constant 0 : index
    %18 = vector.load %arg4[%c0_12, %c0_13] : memref<128x128xbf16, #tpu.memory_space<vmem>>, vector<128x128xbf16>
    %cst_14 = arith.constant dense<0.000000e+00> : vector<8x128xf32>
    %19 = tpu.matmul %17, %18, %cst_14 {dimension_numbers = #tpu.dot_dimension_numbers<[1], [0], [0], [1], [0, 0, 1, 1], [], []>} : vector<8x128xbf16>, vector<128x128xbf16>, vector<8x128xf32> -> vector<8x128xf32>
    %c0_15 = arith.constant 0 : index
    %c0_16 = arith.constant 0 : index
    %20 = vector.load %arg7[%c0_15, %c0_16] : memref<1x128xf32, #tpu.memory_space<vmem>>, vector<1x128xf32>
    %21 = vector.broadcast %20 : vector<1x128xf32> to vector<8x128xf32>
    %22 = arith.addf %19, %21 : vector<8x128xf32>
    %23 = arith.truncf %22 : vector<8x128xf32> to vector<8x128xbf16>
    %c0_17 = arith.constant 0 : index
    %c0_18 = arith.constant 0 : index
    %24 = vector.load %arg8[%c0_17, %c0_18] : memref<8x128xbf16, #tpu.memory_space<vmem>>, vector<8x128xbf16>
    tpu.vector_store %arg8[%c0_17, %c0_18], %23 {strides = array<i32>} : memref<8x128xbf16, #tpu.memory_space<vmem>>, vector<8x128xbf16>,
    return
  }
  func.func @transform_0(%arg0: i32) -> (i32, i32) {
    %c0_i32 = arith.constant 0 : i32
    %c0_i32_0 = arith.constant 0 : i32
    return %arg0, %c0_i32 : i32, i32
  }
  func.func @transform_1(%arg0: i32) -> (i32, i32) {
    %c0_i32 = arith.constant 0 : i32
    %c0_i32_0 = arith.constant 0 : i32
    %c0_i32_1 = arith.constant 0 : i32
    return %c0_i32, %c0_i32_0 : i32, i32
  }
  func.func @transform_2(%arg0: i32) -> (i32, i32) {
    %c0_i32 = arith.constant 0 : i32
    %c0_i32_0 = arith.constant 0 : i32
    %c0_i32_1 = arith.constant 0 : i32
    return %c0_i32, %c0_i32_0 : i32, i32
  }
  func.func @transform_3(%arg0: i32) -> (i32, i32) {
    %c0_i32 = arith.constant 0 : i32
    %c0_i32_0 = arith.constant 0 : i32
    %c0_i32_1 = arith.constant 0 : i32
    return %c0_i32, %c0_i32_0 : i32, i32
  }
  func.func @transform_4(%arg0: i32) -> (i32, i32) {
    %c0_i32 = arith.constant 0 : i32
    %c0_i32_0 = arith.constant 0 : i32
    %c0_i32_1 = arith.constant 0 : i32
    return %c0_i32, %c0_i32_0 : i32, i32
  }
  func.func @transform_5(%arg0: i32) -> (i32, i32) {
    %c0_i32 = arith.constant 0 : i32
    %c0_i32_0 = arith.constant 0 : i32
    %c0_i32_1 = arith.constant 0 : i32
    return %c0_i32, %c0_i32_0 : i32, i32
  }
  func.func @transform_6(%arg0: i32) -> (i32, i32) {
    %c0_i32 = arith.constant 0 : i32
    %c0_i32_0 = arith.constant 0 : i32
    %c0_i32_1 = arith.constant 0 : i32
    return %c0_i32, %c0_i32_0 : i32, i32
  }
  func.func @transform_7(%arg0: i32) -> (i32, i32) {
    %c0_i32 = arith.constant 0 : i32
    %c0_i32_0 = arith.constant 0 : i32
    return %arg0, %c0_i32 : i32, i32
  }
}

module attributes {stable_mosaic.version = 11 : i64} {
  func.func @_mlp_kernel(%arg0: i32, %arg1: memref<8x4xf32, #tpu.memory_space<vmem>>, %arg2: memref<4x128xbf16, #tpu.memory_space<vmem>>, %arg3: memref<128x128xbf16, #tpu.memory_space<vmem>>, %arg4: memref<128x128xbf16, #tpu.memory_space<vmem>>, %arg5: memref<1x128xf32, #tpu.memory_space<vmem>>, %arg6: memref<1x128xf32, #tpu.memory_space<vmem>>, %arg7: memref<1x128xf32, #tpu.memory_space<vmem>>, %arg8: memref<8x128xbf16, #tpu.memory_space<vmem>>) attributes {dimension_semantics = [#tpu.dimension_semantics<parallel>], iteration_bounds = array<i64: 1>, scalar_prefetch = 0 : i64, scratch_operands = 0 : i64, tpu.core_type = #tpu.core_type<tc>, window_params = [{transform_indices = @transform_0, window_bounds = array<i64: 8, 4>}, {pipeline_mode = #tpu.pipeline_mode<synchronous>, transform_indices = @transform_1, window_bounds = array<i64: 4, 128>}, {pipeline_mode = #tpu.pipeline_mode<synchronous>, transform_indices = @transform_2, window_bounds = array<i64: 128, 128>}, {pipeline_mode = #tpu.pipeline_mode<synchronous>, transform_indices = @transform_3, window_bounds = array<i64: 128, 128>}, {pipeline_mode = #tpu.pipeline_mode<synchronous>, transform_indices = @transform_4, window_bounds = array<i64: 1, 128>}, {pipeline_mode = #tpu.pipeline_mode<synchronous>, transform_indices = @transform_5, window_bounds = array<i64: 1, 128>}, {pipeline_mode = #tpu.pipeline_mode<synchronous>, transform_indices = @transform_6, window_bounds = array<i64: 1, 128>}, {transform_indices = @transform_7, window_bounds = array<i64: 8, 128>}]} {
    %c0 = arith.constant 0 : index
    %c0_0 = arith.constant 0 : index
    %0 = vector.load %arg1[%c0, %c0_0] : memref<8x4xf32, #tpu.memory_space<vmem>>, vector<8x4xf32>
    %1 = arith.truncf %0 : vector<8x4xf32> to vector<8x4xbf16>
    %c0_1 = arith.constant 0 : index
    %c0_2 = arith.constant 0 : index
    %2 = vector.load %arg2[%c0_1, %c0_2] : memref<4x128xbf16, #tpu.memory_space<vmem>>, vector<4x128xbf16>
    %cst = arith.constant dense<0.000000e+00> : vector<8x128xf32>
    %3 = tpu.matmul %1, %2, %cst {dimension_numbers = #tpu.dot_dimension_numbers<[1], [0], [0], [1], [0, 0, 1, 1], [], []>} : vector<8x4xbf16>, vector<4x128xbf16>, vector<8x128xf32> -> vector<8x128xf32>
    %c0_3 = arith.constant 0 : index
    %c0_4 = arith.constant 0 : index
    %4 = vector.load %arg5[%c0_3, %c0_4] : memref<1x128xf32, #tpu.memory_space<vmem>>, vector<1x128xf32>
    %5 = vector.broadcast %4 : vector<1x128xf32> to vector<8x128xf32>
    %6 = arith.addf %3, %5 : vector<8x128xf32>
    %cst_5 = arith.constant 0.000000e+00 : f32
    %7 = vector.broadcast %cst_5 : f32 to vector<8x128xf32>
    %8 = arith.maximumf %6, %7 : vector<8x128xf32>
    %9 = arith.truncf %8 : vector<8x128xf32> to vector<8x128xbf16>
    %c0_6 = arith.constant 0 : index
    %c0_7 = arith.constant 0 : index
    %10 = vector.load %arg3[%c0_6, %c0_7] : memref<128x128xbf16, #tpu.memory_space<vmem>>, vector<128x128xbf16>
    %cst_8 = arith.constant dense<0.000000e+00> : vector<8x128xf32>
    %11 = tpu.matmul %9, %10, %cst_8 {dimension_numbers = #tpu.dot_dimension_numbers<[1], [0], [0], [1], [0, 0, 1, 1], [], []>} : vector<8x128xbf16>, vector<128x128xbf16>, vector<8x128xf32> -> vector<8x128xf32>
    %c0_9 = arith.constant 0 : index
    %c0_10 = arith.constant 0 : index
    %12 = vector.load %arg6[%c0_9, %c0_10] : memref<1x128xf32, #tpu.memory_space<vmem>>, vector<1x128xf32>
    %13 = vector.broadcast %12 : vector<1x128xf32> to vector<8x128xf32>
    %14 = arith.addf %11, %13 : vector<8x128xf32>
    %cst_11 = arith.constant 0.000000e+00 : f32
    %15 = vector.broadcast %cst_11 : f32 to vector<8x128xf32>
    %16 = arith.maximumf %14, %15 : vector<8x128xf32>
    %17 = arith.truncf %16 : vector<8x128xf32> to vector<8x128xbf16>
    %c0_12 = arith.constant 0 : index
    %c0_13 = arith.constant 0 : index
    %18 = vector.load %arg4[%c0_12, %c0_13] : memref<128x128xbf16, #tpu.memory_space<vmem>>, vector<128x128xbf16>
    %cst_14 = arith.constant dense<0.000000e+00> : vector<8x128xf32>
    %19 = tpu.matmul %17, %18, %cst_14 {dimension_numbers = #tpu.dot_dimension_numbers<[1], [0], [0], [1], [0, 0, 1, 1], [], []>} : vector<8x128xbf16>, vector<128x128xbf16>, vector<8x128xf32> -> vector<8x128xf32>
    %c0_15 = arith.constant 0 : index
    %c0_16 = arith.constant 0 : index
    %20 = vector.load %arg7[%c0_15, %c0_16] : memref<1x128xf32, #tpu.memory_space<vmem>>, vector<1x128xf32>
    %21 = vector.broadcast %20 : vector<1x128xf32> to vector<8x128xf32>
    %22 = arith.addf %19, %21 : vector<8x128xf32>
    %23 = arith.truncf %22 : vector<8x128xf32> to vector<8x128xbf16>
    %c0_17 = arith.constant 0 : index
    %c0_18 = arith.constant 0 : index
    %24 = vector.load %arg8[%c0_17, %c0_18] : memref<8x128xbf16, #tpu.memory_space<vmem>>, vector<8x128xbf16>
    tpu.vector_store %arg8[%c0_17, %c0_18], %23 {strides = array<i32>} : memref<8x128xbf16, #tpu.memory_space<vmem>>, vector<8x128xbf16>,
    return
  }
  func.func @transform_0(%arg0: i32) -> (i32, i32) {
    %c0_i32 = arith.constant 0 : i32
    %c0_i32_0 = arith.constant 0 : i32
    return %arg0, %c0_i32 : i32, i32
  }
  func.func @transform_1(%arg0: i32) -> (i32, i32) {
    %c0_i32 = arith.constant 0 : i32
    %c0_i32_0 = arith.constant 0 : i32
    %c0_i32_1 = arith.constant 0 : i32
    return %c0_i32, %c0_i32_0 : i32, i32
  }
  func.func @transform_2(%arg0: i32) -> (i32, i32) {
    %c0_i32 = arith.constant 0 : i32
    %c0_i32_0 = arith.constant 0 : i32
    %c0_i32_1 = arith.constant 0 : i32
    return %c0_i32, %c0_i32_0 : i32, i32
  }
  func.func @transform_3(%arg0: i32) -> (i32, i32) {
    %c0_i32 = arith.constant 0 : i32
    %c0_i32_0 = arith.constant 0 : i32
    %c0_i32_1 = arith.constant 0 : i32
    return %c0_i32, %c0_i32_0 : i32, i32
  }
  func.func @transform_4(%arg0: i32) -> (i32, i32) {
    %c0_i32 = arith.constant 0 : i32
    %c0_i32_0 = arith.constant 0 : i32
    %c0_i32_1 = arith.constant 0 : i32
    return %c0_i32, %c0_i32_0 : i32, i32
  }
  func.func @transform_5(%arg0: i32) -> (i32, i32) {
    %c0_i32 = arith.constant 0 : i32
    %c0_i32_0 = arith.constant 0 : i32
    %c0_i32_1 = arith.constant 0 : i32
    return %c0_i32, %c0_i32_0 : i32, i32
  }
  func.func @transform_6(%arg0: i32) -> (i32, i32) {
    %c0_i32 = arith.constant 0 : i32
    %c0_i32_0 = arith.constant 0 : i32
    %c0_i32_1 = arith.constant 0 : i32
    return %c0_i32, %c0_i32_0 : i32, i32
  }
  func.func @transform_7(%arg0: i32) -> (i32, i32) {
    %c0_i32 = arith.constant 0 : i32
    %c0_i32_0 = arith.constant 0 : i32
    return %arg0, %c0_i32 : i32, i32
  }
}

</mosaic_0001>

<llo_original>
// kernel: tpu_custom_call.1
$region0: #{tpu_custom_call.1}
  #allocation0 [shape = 'u32[]', space=smem, size = 0x4, offset = 0x4, fixed_abs, tag = 'smem constant byte address 0x4 - core index']
  #allocation1 [shape = 'u32[72,128]{1,0:T(1,128)}', space=vmem, size = 0x9000, scoped, tag = 'internal scratch']
  %s0 = inlined_call_operand.vmem [shape: f32[8,4], index: 0, kind: input, shape index: {}]
  %s1 = inlined_call_operand.vmem [shape: bf16[4,128], index: 1, kind: input, shape index: {}]
  %s2 = inlined_call_operand.hbm [shape: bf16[128,128], index: 2, kind: input, shape index: {}]
  %s3 = inlined_call_operand.hbm [shape: bf16[128,128], index: 3, kind: input, shape index: {}]
  %s4 = inlined_call_operand.vmem [shape: f32[1,128], index: 4, kind: input, shape index: {}]
  %s5 = inlined_call_operand.vmem [shape: f32[1,128], index: 5, kind: input, shape index: {}]
  %s6 = inlined_call_operand.vmem [shape: f32[1,128], index: 6, kind: input, shape index: {}]
  %s7 = inlined_call_operand.hbm [shape: bf16[8,128], index: 7, kind: output, shape index: {}]
  %s8 = sld [smem:[#allocation0]]
  $region46: #{tpu_custom_call.1} parent=0
    _
  %s10 = ssub.s32 1, %s8
  %s11 = scalar_select 0, %s10, %s8
  $region1: #{tpu_custom_call.1} parent=0
    #allocation2 [shape = 'u8[32768]{0}', space=vmem, size = 0x8000, scoped, tag = 'input window, operand 2, single buffered']
    #allocation3 [shape = 's32[1]{0}', space=sflag, size = 0x4, scoped, tag = 'scoped memory for tpu_custom_call.1']
    #allocation4 [shape = 's32[1]{0}', space=sflag, size = 0x4, scoped, tag = 'scoped memory for tpu_custom_call.1']
    #allocation5 [shape = 'u8[32768]{0}', space=vmem, size = 0x8000, scoped, tag = 'input window, operand 3, single buffered']
    #allocation6 [shape = 's32[1]{0}', space=sflag, size = 0x4, scoped, tag = 'scoped memory for tpu_custom_call.1']
    #allocation7 [shape = 'u8[2048]{0}', space=vmem, size = 0x800, scoped, tag = 'output window, operand 0, single buffered']
    %12 = vsyncpa [#allocation3], 0
    %13 = vsyncpa [#allocation6], 0
    %14 = vsyncpa [#allocation4], 0
    // Predicated region
    $region2: #{tpu_custom_call.1} parent=1 // pred_check
      _
    $region3: #{tpu_custom_call.1} parent=1 // pred_check_branch
      %16 = sbr.rel (0) target = $region5
    $region4: #{tpu_custom_call.1} parent=1 // pred_region
      _
    $region5: #{tpu_custom_call.1} parent=1 // pred_fallthru
      _
    // Predicated region
    $region6: #{tpu_custom_call.1} parent=1 // pred_check
      _
    $region7: #{tpu_custom_call.1} parent=1 // pred_check_branch
      %18 = sbr.rel (0) target = $region9
    $region8: #{tpu_custom_call.1} parent=1 // pred_region
      _
    $region9: #{tpu_custom_call.1} parent=1 // pred_fallthru
      _
    // Predicated region
    $region10: #{tpu_custom_call.1} parent=1 // pred_check
      _
    $region11: #{tpu_custom_call.1} parent=1 // pred_check_branch
      %20 = sbr.rel (0) target = $region13
    $region12: #{tpu_custom_call.1} parent=1 // pred_region
      %22 = vsyncadd [#allocation3], 0
      %s23 = sshll.u32 %s2, 4
      %s24 = int_to_ptr.hbm [resolvable:$true] %s23
      %s25 = sshll.u32 [#allocation2], 4
      %s26 = int_to_ptr.vmem [resolvable:$true] %s25
      %31 = dma.hbm_to_vmem [thread:$0]  %s24, 1024, %s26, [#allocation3], 64, 64, 4
    $region13: #{tpu_custom_call.1} parent=1 // pred_fallthru
      _
    // Predicated region
    $region14: #{tpu_custom_call.1} parent=1 // pred_check
      _
    $region15: #{tpu_custom_call.1} parent=1 // pred_check_branch
      %33 = sbr.rel (0) target = $region17
    $region16: #{tpu_custom_call.1} parent=1 // pred_region
      %35 = vsyncadd [#allocation6], 0
      %s36 = sshll.u32 %s3, 4
      %s37 = int_to_ptr.hbm [resolvable:$true] %s36
      %s38 = sshll.u32 [#allocation5], 4
      %s39 = int_to_ptr.vmem [resolvable:$true] %s38
      %44 = dma.hbm_to_vmem [thread:$0]  %s37, 1024, %s39, [#allocation6], 64, 64, 4
    $region17: #{tpu_custom_call.1} parent=1 // pred_fallthru
      _
    // Predicated region
    $region18: #{tpu_custom_call.1} parent=1 // pred_check
      _
    $region19: #{tpu_custom_call.1} parent=1 // pred_check_branch
      %46 = sbr.rel (0) target = $region21
    $region20: #{tpu_custom_call.1} parent=1 // pred_region
      _
    $region21: #{tpu_custom_call.1} parent=1 // pred_fallthru
      _
    // Predicated region
    $region22: #{tpu_custom_call.1} parent=1 // pred_check
      _
    $region23: #{tpu_custom_call.1} parent=1 // pred_check_branch
      %48 = sbr.rel (0) target = $region25
    $region24: #{tpu_custom_call.1} parent=1 // pred_region
      _
    $region25: #{tpu_custom_call.1} parent=1 // pred_fallthru
      _
    // Predicated region
    $region26: #{tpu_custom_call.1} parent=1 // pred_check
      _
    $region27: #{tpu_custom_call.1} parent=1 // pred_check_branch
      %50 = sbr.rel (0) target = $region29
    $region28: #{tpu_custom_call.1} parent=1 // pred_region
      _
    $region29: #{tpu_custom_call.1} parent=1 // pred_fallthru
      _
    // Predicated region
    $region30: #{tpu_custom_call.1} parent=1 // pred_check
      _
    $region31: #{tpu_custom_call.1} parent=1 // pred_check_branch
      %52 = sbr.rel (0) target = $region33
    $region32: #{tpu_custom_call.1} parent=1 // pred_region
      %54 = dma.done [#allocation3], 1024
    $region33: #{tpu_custom_call.1} parent=1 // pred_fallthru
      _
    // Predicated region
    $region34: #{tpu_custom_call.1} parent=1 // pred_check
      _
    $region35: #{tpu_custom_call.1} parent=1 // pred_check_branch
      %56 = sbr.rel (0) target = $region37
    $region36: #{tpu_custom_call.1} parent=1 // pred_region
      %58 = dma.done [#allocation6], 1024
    $region37: #{tpu_custom_call.1} parent=1 // pred_fallthru
      _
    %v60 = vld [vmem:[%s0] sm:$0xff]
    %v61 = vpack.c.bf16 %v60, %v60
    %v62 = vld [vmem:[%s1] sm:$0x3]
    %v63 = vld [vmem:[%s4] sm:$0x1]
    %v65 = vperm.slane %v63, 0
    %vm67 = vcmask 31744
    %v69 = vsel %vm67, %v61, 0
    %vm71 = vcmask 1041408
    %v73 = vsel %vm71, %v62, 0
    %75 = vmatpush.bf16.msra.mxu0 0
    %76 = vmatpush.bf16.msra.mxu0 0
    %77 = vmatpush.bf16.msra.mxu0 0
    %78 = vmatpush.bf16.msra.mxu0 0
    %79 = vmatpush.bf16.msra.mxu0 0
    %80 = vmatpush.bf16.msra.mxu0 0
    %81 = vmatpush.bf16.msra.mxu0 0
    %82 = vmatpush.bf16.msra.mxu0 %v73
    %83 = vmatmul.bf16.gmra.mxu0 %v69
    %v84 = vpop.f32.mrf.mxu0
    %v85 = vadd.f32 %v65, %v84
    %v86 = vpop.f32.mrf.mxu0
    %87 = vdwg.mxu0
    %v88 = vmax.f32 %v85, 0.0
    %v89 = vpack.c.bf16 %v88, %v88
    %v90 = vld [vmem:[#allocation2] sm:$0xf]
    %v91 = vld [vmem:[#allocation2 + $0x4] sm:$0xf]
    %v92 = vld [vmem:[#allocation2 + $0x8] sm:$0xf]
    %v93 = vld [vmem:[#allocation2 + $0xc] sm:$0xf]
    %v94 = vld [vmem:[#allocation2 + $0x10] sm:$0xf]
    %v95 = vld [vmem:[#allocation2 + $0x14] sm:$0xf]
    %v96 = vld [vmem:[#allocation2 + $0x18] sm:$0xf]
    %v97 = vld [vmem:[#allocation2 + $0x1c] sm:$0xf]
    %v98 = vld [vmem:[#allocation2 + $0x20] sm:$0xf]
    %v99 = vld [vmem:[#allocation2 + $0x24] sm:$0xf]
    %v100 = vld [vmem:[#allocation2 + $0x28] sm:$0xf]
    %v101 = vld [vmem:[#allocation2 + $0x2c] sm:$0xf]
    %v102 = vld [vmem:[#allocation2 + $0x30] sm:$0xf]
    %v103 = vld [vmem:[#allocation2 + $0x34] sm:$0xf]
    %v104 = vld [vmem:[#allocation2 + $0x38] sm:$0xf]
    %v105 = vld [vmem:[#allocation2 + $0x3c] sm:$0xf]
    %v106 = vld [vmem:[%s5] sm:$0x1]
    %v108 = vperm.slane %v106, 0
    %v126 = vunpack.c.l.b16 %v90
    %v127 = vunpack.c.l.b16 %v91
    %v128 = vunpack.c.l.b16 %v92
    %v129 = vunpack.c.l.b16 %v93
    %v130 = vunpack.c.l.b16 %v94
    %v131 = vunpack.c.l.b16 %v95
    %v132 = vunpack.c.l.b16 %v96
    %v133 = vunpack.c.l.b16 %v97
    %v134 = vunpack.c.l.b16 %v98
    %v135 = vunpack.c.l.b16 %v99
    %v136 = vunpack.c.l.b16 %v100
    %v137 = vunpack.c.l.b16 %v101
    %v138 = vunpack.c.l.b16 %v102
    %v139 = vunpack.c.l.b16 %v103
    %v140 = vunpack.c.l.b16 %v104
    %v141 = vunpack.c.l.b16 %v105
    %v142 = vpack.c.b16 %v127, %v126
    %v143 = vpack.c.b16 %v129, %v128
    %v144 = vpack.c.b16 %v131, %v130
    %v145 = vpack.c.b16 %v133, %v132
    %v146 = vpack.c.b16 %v135, %v134
    %v147 = vpack.c.b16 %v137, %v136
    %v148 = vpack.c.b16 %v139, %v138
    %v149 = vpack.c.b16 %v141, %v140
    %158 = vmatpush.bf16.msra.mxu0 %v149
    %159 = vmatpush.bf16.msra.mxu0 %v148
    %160 = vmatpush.bf16.msra.mxu0 %v147
    %161 = vmatpush.bf16.msra.mxu0 %v146
    %162 = vmatpush.bf16.msra.mxu0 %v145
    %163 = vmatpush.bf16.msra.mxu0 %v144
    %164 = vmatpush.bf16.msra.mxu0 %v143
    %165 = vmatpush.bf16.msra.mxu0 %v142
    %166 = vmatmul.bf16.gmra.mxu0 %v89
    %v167 = vpop.f32.mrf.mxu0
    %v168 = vadd.f32 %v108, %v167
    %v169 = vpop.f32.mrf.mxu0
    %170 = vdwg.mxu0
    %v171 = vmax.f32 %v168, 0.0
    %v172 = vpack.c.bf16 %v171, %v171
    %v173 = vld [vmem:[#allocation5] sm:$0xf]
    %v174 = vld [vmem:[#allocation5 + $0x4] sm:$0xf]
    %v175 = vld [vmem:[#allocation5 + $0x8] sm:$0xf]
    %v176 = vld [vmem:[#allocation5 + $0xc] sm:$0xf]
    %v177 = vld [vmem:[#allocation5 + $0x10] sm:$0xf]
    %v178 = vld [vmem:[#allocation5 + $0x14] sm:$0xf]
    %v179 = vld [vmem:[#allocation5 + $0x18] sm:$0xf]
    %v180 = vld [vmem:[#allocation5 + $0x1c] sm:$0xf]
    %v181 = vld [vmem:[#allocation5 + $0x20] sm:$0xf]
    %v182 = vld [vmem:[#allocation5 + $0x24] sm:$0xf]
    %v183 = vld [vmem:[#allocation5 + $0x28] sm:$0xf]
    %v184 = vld [vmem:[#allocation5 + $0x2c] sm:$0xf]
    %v185 = vld [vmem:[#allocation5 + $0x30] sm:$0xf]
    %v186 = vld [vmem:[#allocation5 + $0x34] sm:$0xf]
    %v187 = vld [vmem:[#allocation5 + $0x38] sm:$0xf]
    %v188 = vld [vmem:[#allocation5 + $0x3c] sm:$0xf]
    %v189 = vld [vmem:[%s6] sm:$0x1]
    %v191 = vperm.slane %v189, 0
    %v209 = vunpack.c.l.b16 %v173
    %v210 = vunpack.c.l.b16 %v174
    %v211 = vunpack.c.l.b16 %v175
    %v212 = vunpack.c.l.b16 %v176
    %v213 = vunpack.c.l.b16 %v177
    %v214 = vunpack.c.l.b16 %v178
    %v215 = vunpack.c.l.b16 %v179
    %v216 = vunpack.c.l.b16 %v180
    %v217 = vunpack.c.l.b16 %v181
    %v218 = vunpack.c.l.b16 %v182
    %v219 = vunpack.c.l.b16 %v183
    %v220 = vunpack.c.l.b16 %v184
    %v221 = vunpack.c.l.b16 %v185
    %v222 = vunpack.c.l.b16 %v186
    %v223 = vunpack.c.l.b16 %v187
    %v224 = vunpack.c.l.b16 %v188
    %v225 = vpack.c.b16 %v210, %v209
    %v226 = vpack.c.b16 %v212, %v211
    %v227 = vpack.c.b16 %v214, %v213
    %v228 = vpack.c.b16 %v216, %v215
    %v229 = vpack.c.b16 %v218, %v217
    %v230 = vpack.c.b16 %v220, %v219
    %v231 = vpack.c.b16 %v222, %v221
    %v232 = vpack.c.b16 %v224, %v223
    %241 = vmatpush.bf16.msra.mxu0 %v232
    %242 = vmatpush.bf16.msra.mxu0 %v231
    %243 = vmatpush.bf16.msra.mxu0 %v230
    %244 = vmatpush.bf16.msra.mxu0 %v229
    %245 = vmatpush.bf16.msra.mxu0 %v228
    %246 = vmatpush.bf16.msra.mxu0 %v227
    %247 = vmatpush.bf16.msra.mxu0 %v226
    %248 = vmatpush.bf16.msra.mxu0 %v225
    %249 = vmatmul.bf16.gmra.mxu0 %v172
    %v250 = vpop.f32.mrf.mxu0
    %v251 = vadd.f32 %v191, %v250
    %v252 = vpop.f32.mrf.mxu0
    %253 = vdwg.mxu0
    %v254 = vpack.c.bf16 %v251, %v251
    %255 = vst [vmem:[#allocation7] sm:$0xf] %v254
    // Predicated region
    $region38: #{tpu_custom_call.1} parent=1 // pred_check
      _
    $region39: #{tpu_custom_call.1} parent=1 // pred_check_branch
      %257 = sbr.rel (0) target = $region41
    $region40: #{tpu_custom_call.1} parent=1 // pred_region
      %259 = vsyncadd [#allocation4], 0
      %s261 = sshll.u32 [#allocation7], 4
      %s262 = int_to_ptr.vmem [resolvable:$true] %s261
      %s263 = sshll.u32 %s7, 4
      %s264 = int_to_ptr.hbm [resolvable:$true] %s263
      %266 = dma.vmem_to_hbm [thread:$0]  %s262, 64, %s264, [#allocation4]
    $region41: #{tpu_custom_call.1} parent=1 // pred_fallthru
      _
    // Predicated region
    $region42: #{tpu_custom_call.1} parent=1 // pred_check
      _
    $region43: #{tpu_custom_call.1} parent=1 // pred_check_branch
      %268 = sbr.rel (0) target = $region45
    $region44: #{tpu_custom_call.1} parent=1 // pred_region
      %270 = dma.done [#allocation4], 64
    $region45: #{tpu_custom_call.1} parent=1 // pred_fallthru
      _
    %271 = vsyncpa [#allocation3], 1
    %272 = vsyncpa [#allocation6], 1
    %273 = vsyncpa [#allocation4], 1

// kernel: tpu_custom_call.1
$region0: #{tpu_custom_call.1}
  #allocation0 [shape = 'u32[]', space=smem, size = 0x4, offset = 0x4, fixed_abs, tag = 'smem constant byte address 0x4 - core index']
  #allocation1 [shape = 'u32[72,128]{1,0:T(1,128)}', space=vmem, size = 0x9000, scoped, tag = 'internal scratch']
  %s0 = inlined_call_operand.vmem [shape: f32[8,4], index: 0, kind: input, shape index: {}]
  %s1 = inlined_call_operand.vmem [shape: bf16[4,128], index: 1, kind: input, shape index: {}]
  %s2 = inlined_call_operand.hbm [shape: bf16[128,128], index: 2, kind: input, shape index: {}]
  %s3 = inlined_call_operand.hbm [shape: bf16[128,128], index: 3, kind: input, shape index: {}]
  %s4 = inlined_call_operand.vmem [shape: f32[1,128], index: 4, kind: input, shape index: {}]
  %s5 = inlined_call_operand.vmem [shape: f32[1,128], index: 5, kind: input, shape index: {}]
  %s6 = inlined_call_operand.vmem [shape: f32[1,128], index: 6, kind: input, shape index: {}]
  %s7 = inlined_call_operand.hbm [shape: bf16[8,128], index: 7, kind: output, shape index: {}]
  %s8 = sld [smem:[#allocation0]]
  $region46: #{tpu_custom_call.1} parent=0
    _
  %s10 = ssub.s32 1, %s8
  %s11 = scalar_select 0, %s10, %s8
  $region1: #{tpu_custom_call.1} parent=0
    #allocation2 [shape = 'u8[32768]{0}', space=vmem, size = 0x8000, scoped, tag = 'input window, operand 2, single buffered']
    #allocation3 [shape = 's32[1]{0}', space=sflag, size = 0x4, scoped, tag = 'scoped memory for tpu_custom_call.1']
    #allocation4 [shape = 's32[1]{0}', space=sflag, size = 0x4, scoped, tag = 'scoped memory for tpu_custom_call.1']
    #allocation5 [shape = 'u8[32768]{0}', space=vmem, size = 0x8000, scoped, tag = 'input window, operand 3, single buffered']
    #allocation6 [shape = 's32[1]{0}', space=sflag, size = 0x4, scoped, tag = 'scoped memory for tpu_custom_call.1']
    #allocation7 [shape = 'u8[2048]{0}', space=vmem, size = 0x800, scoped, tag = 'output window, operand 0, single buffered']
    %12 = vsyncpa [#allocation3], 0
    %13 = vsyncpa [#allocation6], 0
    %14 = vsyncpa [#allocation4], 0
    // Predicated region
    $region2: #{tpu_custom_call.1} parent=1 // pred_check
      _
    $region3: #{tpu_custom_call.1} parent=1 // pred_check_branch
      %16 = sbr.rel (0) target = $region5
    $region4: #{tpu_custom_call.1} parent=1 // pred_region
      _
    $region5: #{tpu_custom_call.1} parent=1 // pred_fallthru
      _
    // Predicated region
    $region6: #{tpu_custom_call.1} parent=1 // pred_check
      _
    $region7: #{tpu_custom_call.1} parent=1 // pred_check_branch
      %18 = sbr.rel (0) target = $region9
    $region8: #{tpu_custom_call.1} parent=1 // pred_region
      _
    $region9: #{tpu_custom_call.1} parent=1 // pred_fallthru
      _
    // Predicated region
    $region10: #{tpu_custom_call.1} parent=1 // pred_check
      _
    $region11: #{tpu_custom_call.1} parent=1 // pred_check_branch
      %20 = sbr.rel (0) target = $region13
    $region12: #{tpu_custom_call.1} parent=1 // pred_region
      %22 = vsyncadd [#allocation3], 0
      %s23 = sshll.u32 %s2, 4
      %s24 = int_to_ptr.hbm [resolvable:$true] %s23
      %s25 = sshll.u32 [#allocation2], 4
      %s26 = int_to_ptr.vmem [resolvable:$true] %s25
      %31 = dma.hbm_to_vmem [thread:$0]  %s24, 1024, %s26, [#allocation3], 64, 64, 4
    $region13: #{tpu_custom_call.1} parent=1 // pred_fallthru
      _
    // Predicated region
    $region14: #{tpu_custom_call.1} parent=1 // pred_check
      _
    $region15: #{tpu_custom_call.1} parent=1 // pred_check_branch
      %33 = sbr.rel (0) target = $region17
    $region16: #{tpu_custom_call.1} parent=1 // pred_region
      %35 = vsyncadd [#allocation6], 0
      %s36 = sshll.u32 %s3, 4
      %s37 = int_to_ptr.hbm [resolvable:$true] %s36
      %s38 = sshll.u32 [#allocation5], 4
      %s39 = int_to_ptr.vmem [resolvable:$true] %s38
      %44 = dma.hbm_to_vmem [thread:$0]  %s37, 1024, %s39, [#allocation6], 64, 64, 4
    $region17: #{tpu_custom_call.1} parent=1 // pred_fallthru
      _
    // Predicated region
    $region18: #{tpu_custom_call.1} parent=1 // pred_check
      _
    $region19: #{tpu_custom_call.1} parent=1 // pred_check_branch
      %46 = sbr.rel (0) target = $region21
    $region20: #{tpu_custom_call.1} parent=1 // pred_region
      _
    $region21: #{tpu_custom_call.1} parent=1 // pred_fallthru
      _
    // Predicated region
    $region22: #{tpu_custom_call.1} parent=1 // pred_check
      _
    $region23: #{tpu_custom_call.1} parent=1 // pred_check_branch
      %48 = sbr.rel (0) target = $region25
    $region24: #{tpu_custom_call.1} parent=1 // pred_region
      _
    $region25: #{tpu_custom_call.1} parent=1 // pred_fallthru
      _
    // Predicated region
    $region26: #{tpu_custom_call.1} parent=1 // pred_check
      _
    $region27: #{tpu_custom_call.1} parent=1 // pred_check_branch
      %50 = sbr.rel (0) target = $region29
    $region28: #{tpu_custom_call.1} parent=1 // pred_region
      _
    $region29: #{tpu_custom_call.1} parent=1 // pred_fallthru
      _
    // Predicated region
    $region30: #{tpu_custom_call.1} parent=1 // pred_check
      _
    $region31: #{tpu_custom_call.1} parent=1 // pred_check_branch
      %52 = sbr.rel (0) target = $region33
    $region32: #{tpu_custom_call.1} parent=1 // pred_region
      %54 = dma.done [#allocation3], 1024
    $region33: #{tpu_custom_call.1} parent=1 // pred_fallthru
      _
    // Predicated region
    $region34: #{tpu_custom_call.1} parent=1 // pred_check
      _
    $region35: #{tpu_custom_call.1} parent=1 // pred_check_branch
      %56 = sbr.rel (0) target = $region37
    $region36: #{tpu_custom_call.1} parent=1 // pred_region
      %58 = dma.done [#allocation6], 1024
    $region37: #{tpu_custom_call.1} parent=1 // pred_fallthru
      _
    %v60 = vld [vmem:[%s0] sm:$0xff]
    %v61 = vpack.c.bf16 %v60, %v60
    %v62 = vld [vmem:[%s1] sm:$0x3]
    %v63 = vld [vmem:[%s4] sm:$0x1]
    %v65 = vperm.slane %v63, 0
    %vm67 = vcmask 31744
    %v69 = vsel %vm67, %v61, 0
    %vm71 = vcmask 1041408
    %v73 = vsel %vm71, %v62, 0
    %75 = vmatpush.bf16.msra.mxu0 0
    %76 = vmatpush.bf16.msra.mxu0 0
    %77 = vmatpush.bf16.msra.mxu0 0
    %78 = vmatpush.bf16.msra.mxu0 0
    %79 = vmatpush.bf16.msra.mxu0 0
    %80 = vmatpush.bf16.msra.mxu0 0
    %81 = vmatpush.bf16.msra.mxu0 0
    %82 = vmatpush.bf16.msra.mxu0 %v73
    %83 = vmatmul.bf16.gmra.mxu0 %v69
    %v84 = vpop.f32.mrf.mxu0
    %v85 = vadd.f32 %v65, %v84
    %v86 = vpop.f32.mrf.mxu0
    %87 = vdwg.mxu0
    %v88 = vmax.f32 %v85, 0.0
    %v89 = vpack.c.bf16 %v88, %v88
    %v90 = vld [vmem:[#allocation2] sm:$0xf]
    %v91 = vld [vmem:[#allocation2 + $0x4] sm:$0xf]
    %v92 = vld [vmem:[#allocation2 + $0x8] sm:$0xf]
    %v93 = vld [vmem:[#allocation2 + $0xc] sm:$0xf]
    %v94 = vld [vmem:[#allocation2 + $0x10] sm:$0xf]
    %v95 = vld [vmem:[#allocation2 + $0x14] sm:$0xf]
    %v96 = vld [vmem:[#allocation2 + $0x18] sm:$0xf]
    %v97 = vld [vmem:[#allocation2 + $0x1c] sm:$0xf]
    %v98 = vld [vmem:[#allocation2 + $0x20] sm:$0xf]
    %v99 = vld [vmem:[#allocation2 + $0x24] sm:$0xf]
    %v100 = vld [vmem:[#allocation2 + $0x28] sm:$0xf]
    %v101 = vld [vmem:[#allocation2 + $0x2c] sm:$0xf]
    %v102 = vld [vmem:[#allocation2 + $0x30] sm:$0xf]
    %v103 = vld [vmem:[#allocation2 + $0x34] sm:$0xf]
    %v104 = vld [vmem:[#allocation2 + $0x38] sm:$0xf]
    %v105 = vld [vmem:[#allocation2 + $0x3c] sm:$0xf]
    %v106 = vld [vmem:[%s5] sm:$0x1]
    %v108 = vperm.slane %v106, 0
    %v126 = vunpack.c.l.b16 %v90
    %v127 = vunpack.c.l.b16 %v91
    %v128 = vunpack.c.l.b16 %v92
    %v129 = vunpack.c.l.b16 %v93
    %v130 = vunpack.c.l.b16 %v94
    %v131 = vunpack.c.l.b16 %v95
    %v132 = vunpack.c.l.b16 %v96
    %v133 = vunpack.c.l.b16 %v97
    %v134 = vunpack.c.l.b16 %v98
    %v135 = vunpack.c.l.b16 %v99
    %v136 = vunpack.c.l.b16 %v100
    %v137 = vunpack.c.l.b16 %v101
    %v138 = vunpack.c.l.b16 %v102
    %v139 = vunpack.c.l.b16 %v103
    %v140 = vunpack.c.l.b16 %v104
    %v141 = vunpack.c.l.b16 %v105
    %v142 = vpack.c.b16 %v127, %v126
    %v143 = vpack.c.b16 %v129, %v128
    %v144 = vpack.c.b16 %v131, %v130
    %v145 = vpack.c.b16 %v133, %v132
    %v146 = vpack.c.b16 %v135, %v134
    %v147 = vpack.c.b16 %v137, %v136
    %v148 = vpack.c.b16 %v139, %v138
    %v149 = vpack.c.b16 %v141, %v140
    %158 = vmatpush.bf16.msra.mxu0 %v149
    %159 = vmatpush.bf16.msra.mxu0 %v148
    %160 = vmatpush.bf16.msra.mxu0 %v147
    %161 = vmatpush.bf16.msra.mxu0 %v146
    %162 = vmatpush.bf16.msra.mxu0 %v145
    %163 = vmatpush.bf16.msra.mxu0 %v144
    %164 = vmatpush.bf16.msra.mxu0 %v143
    %165 = vmatpush.bf16.msra.mxu0 %v142
    %166 = vmatmul.bf16.gmra.mxu0 %v89
    %v167 = vpop.f32.mrf.mxu0
    %v168 = vadd.f32 %v108, %v167
    %v169 = vpop.f32.mrf.mxu0
    %170 = vdwg.mxu0
    %v171 = vmax.f32 %v168, 0.0
    %v172 = vpack.c.bf16 %v171, %v171
    %v173 = vld [vmem:[#allocation5] sm:$0xf]
    %v174 = vld [vmem:[#allocation5 + $0x4] sm:$0xf]
    %v175 = vld [vmem:[#allocation5 + $0x8] sm:$0xf]
    %v176 = vld [vmem:[#allocation5 + $0xc] sm:$0xf]
    %v177 = vld [vmem:[#allocation5 + $0x10] sm:$0xf]
    %v178 = vld [vmem:[#allocation5 + $0x14] sm:$0xf]
    %v179 = vld [vmem:[#allocation5 + $0x18] sm:$0xf]
    %v180 = vld [vmem:[#allocation5 + $0x1c] sm:$0xf]
    %v181 = vld [vmem:[#allocation5 + $0x20] sm:$0xf]
    %v182 = vld [vmem:[#allocation5 + $0x24] sm:$0xf]
    %v183 = vld [vmem:[#allocation5 + $0x28] sm:$0xf]
    %v184 = vld [vmem:[#allocation5 + $0x2c] sm:$0xf]
    %v185 = vld [vmem:[#allocation5 + $0x30] sm:$0xf]
    %v186 = vld [vmem:[#allocation5 + $0x34] sm:$0xf]
    %v187 = vld [vmem:[#allocation5 + $0x38] sm:$0xf]
    %v188 = vld [vmem:[#allocation5 + $0x3c] sm:$0xf]
    %v189 = vld [vmem:[%s6] sm:$0x1]
    %v191 = vperm.slane %v189, 0
    %v209 = vunpack.c.l.b16 %v173
    %v210 = vunpack.c.l.b16 %v174
    %v211 = vunpack.c.l.b16 %v175
    %v212 = vunpack.c.l.b16 %v176
    %v213 = vunpack.c.l.b16 %v177
    %v214 = vunpack.c.l.b16 %v178
    %v215 = vunpack.c.l.b16 %v179
    %v216 = vunpack.c.l.b16 %v180
    %v217 = vunpack.c.l.b16 %v181
    %v218 = vunpack.c.l.b16 %v182
    %v219 = vunpack.c.l.b16 %v183
    %v220 = vunpack.c.l.b16 %v184
    %v221 = vunpack.c.l.b16 %v185
    %v222 = vunpack.c.l.b16 %v186
    %v223 = vunpack.c.l.b16 %v187
    %v224 = vunpack.c.l.b16 %v188
    %v225 = vpack.c.b16 %v210, %v209
    %v226 = vpack.c.b16 %v212, %v211
    %v227 = vpack.c.b16 %v214, %v213
    %v228 = vpack.c.b16 %v216, %v215
    %v229 = vpack.c.b16 %v218, %v217
    %v230 = vpack.c.b16 %v220, %v219
    %v231 = vpack.c.b16 %v222, %v221
    %v232 = vpack.c.b16 %v224, %v223
    %241 = vmatpush.bf16.msra.mxu0 %v232
    %242 = vmatpush.bf16.msra.mxu0 %v231
    %243 = vmatpush.bf16.msra.mxu0 %v230
    %244 = vmatpush.bf16.msra.mxu0 %v229
    %245 = vmatpush.bf16.msra.mxu0 %v228
    %246 = vmatpush.bf16.msra.mxu0 %v227
    %247 = vmatpush.bf16.msra.mxu0 %v226
    %248 = vmatpush.bf16.msra.mxu0 %v225
    %249 = vmatmul.bf16.gmra.mxu0 %v172
    %v250 = vpop.f32.mrf.mxu0
    %v251 = vadd.f32 %v191, %v250
    %v252 = vpop.f32.mrf.mxu0
    %253 = vdwg.mxu0
    %v254 = vpack.c.bf16 %v251, %v251
    %255 = vst [vmem:[#allocation7] sm:$0xf] %v254
    // Predicated region
    $region38: #{tpu_custom_call.1} parent=1 // pred_check
      _
    $region39: #{tpu_custom_call.1} parent=1 // pred_check_branch
      %257 = sbr.rel (0) target = $region41
    $region40: #{tpu_custom_call.1} parent=1 // pred_region
      %259 = vsyncadd [#allocation4], 0
      %s261 = sshll.u32 [#allocation7], 4
      %s262 = int_to_ptr.vmem [resolvable:$true] %s261
      %s263 = sshll.u32 %s7, 4
      %s264 = int_to_ptr.hbm [resolvable:$true] %s263
      %266 = dma.vmem_to_hbm [thread:$0]  %s262, 64, %s264, [#allocation4]
    $region41: #{tpu_custom_call.1} parent=1 // pred_fallthru
      _
    // Predicated region
    $region42: #{tpu_custom_call.1} parent=1 // pred_check
      _
    $region43: #{tpu_custom_call.1} parent=1 // pred_check_branch
      %268 = sbr.rel (0) target = $region45
    $region44: #{tpu_custom_call.1} parent=1 // pred_region
      %270 = dma.done [#allocation4], 64
    $region45: #{tpu_custom_call.1} parent=1 // pred_fallthru
      _
    %271 = vsyncpa [#allocation3], 1
    %272 = vsyncpa [#allocation6], 1
    %273 = vsyncpa [#allocation4], 1

</llo_original>
